<compile_context>
chip_gen: v7x
topology: tpu7x:2x2x1
jax: 0.10.0
libtpu: 0.0.40
codegen_flags: <defaults>
</compile_context>

<pallas_src>
import functools

import jax
import jax.numpy as jnp
from jax.experimental import pallas as pl
from jax.experimental.pallas import tpu as pltpu


def _bbox_kernel(ind_ref, reg_ref, wh_ref, out_ref, *, output_w, wh_scale):
    """One grid step over an object-axis tile.

    ind_ref : (B, tn)      flat heatmap indices (float)
    reg_ref : (B, tn, 3)   center offsets  [dx_left, dx_right, dy]
    wh_ref  : (B, tn, 3)   box sizes       [w_left, w_right, h]
    out_ref : (B, 8, tn)   rows = [bidx, l1, t1, r1, b1, l2, r2, keep_sum]
    """
    bsz, tn = ind_ref.shape

    ind = ind_ref[...][:, None, :]                        # (B, 1, tn), lane-dense
    reg_t = jnp.transpose(reg_ref[...], (0, 2, 1))        # (B, 3, tn)
    wh_t = jnp.transpose(wh_ref[...], (0, 2, 1))          # (B, 3, tn)

    reg0 = reg_t[:, 0:1, :]
    reg1 = reg_t[:, 1:2, :]
    reg2 = reg_t[:, 2:3, :]
    wh0 = wh_t[:, 0:1, :]
    wh1 = wh_t[:, 1:2, :]
    wh2 = wh_t[:, 2:3, :]

    # Strength-reduced decode of the flat heatmap index, plus a compare/select
    # fixup so it is exact even for non-power-of-two output_w.
    inv_w = jnp.float32(1.0 / output_w)
    w_f = jnp.float32(output_w)
    ys0 = jnp.floor(ind * inv_w)                          # ind // output_w
    xs0 = ind - ys0 * w_f                                 # ind %  output_w
    over = xs0 >= w_f
    under = xs0 < jnp.float32(0.0)
    ys0 = jnp.where(over, ys0 + 1.0, jnp.where(under, ys0 - 1.0, ys0))
    xs0 = jnp.where(over, xs0 - w_f, jnp.where(under, xs0 + w_f, xs0))

    xs_c = xs0 + reg0                                     # left-image center x
    xs_r = xs0 + reg1                                     # right-image center x
    ys_c = ys0 + reg2                                     # shared center y

    half = jnp.float32(0.5 * wh_scale)
    hw0 = half * wh0
    hw1 = half * wh1
    hh = half * wh2

    # int32 iota + convert (kept instead of a float iota: integer iota is the
    # safe Mosaic lowering path; the convert is one VPU op on a tiny slab).
    bidx = jax.lax.broadcasted_iota(jnp.int32, (bsz, 1, tn), 0).astype(jnp.float32)

    l1 = xs_c - hw0
    t1 = ys_c - hh
    r1 = xs_c + hw0
    b1 = ys_c + hh
    l2 = xs_r - hw1
    r2 = xs_r + hw1

    # Direct full-lane row stores; no duplicated rows, 8 rows = one sublane tile.
    out_ref[:, 0:1, :] = bidx
    out_ref[:, 1:2, :] = l1
    out_ref[:, 2:3, :] = t1
    out_ref[:, 3:4, :] = r1
    out_ref[:, 4:5, :] = b1
    out_ref[:, 5:6, :] = l2
    out_ref[:, 6:7, :] = r2
    out_ref[:, 7:8, :] = l1 + t1 + r1 + b1                # keep-sum (fills tile)


@functools.partial(jax.jit, static_argnames=("output_w", "wh_scale"))
def model_with_loss_forward(ind_float, wh, reg, *, output_w, wh_scale):
    """JAX/Pallas equivalent of the self-contained part of ModelWithLoss.forward."""
    B, N = ind_float.shape

    ind_f = ind_float.astype(jnp.float32)
    reg_f = reg.astype(jnp.float32)
    wh_f = wh.astype(jnp.float32)

    # Pad the object axis to a lane multiple so every row is whole unmasked
    # (8, 128) tiles on all TPU generations.
    n_pad = ((N + 127) // 128) * 128
    if n_pad != N:
        pad = n_pad - N
        ind_f = jnp.pad(ind_f, ((0, 0), (0, pad)))
        reg_f = jnp.pad(reg_f, ((0, 0), (0, pad), (0, 0)))
        wh_f = jnp.pad(wh_f, ((0, 0), (0, pad), (0, 0)))

    # Tile the object axis once it is large: bounds per-step VMEM (v7x has the
    # smallest budget) and lets the "parallel" axis shard across v7x's two
    # TensorCores.  At toy sizes the grid is (1,).
    if n_pad <= 2048:
        tile_n = n_pad
    else:
        tile_n = next(c for c in (2048, 1024, 512, 256, 128) if n_pad % c == 0)
    grid = (n_pad // tile_n,)

    kernel = functools.partial(
        _bbox_kernel, output_w=float(output_w), wh_scale=float(wh_scale))

    vmem = pltpu.MemorySpace.VMEM
    out = pl.pallas_call(
        kernel,
        grid=grid,
        in_specs=[
            pl.BlockSpec((B, tile_n), lambda j: (0, j), memory_space=vmem),
            pl.BlockSpec((B, tile_n, 3), lambda j: (0, j, 0), memory_space=vmem),
            pl.BlockSpec((B, tile_n, 3), lambda j: (0, j, 0), memory_space=vmem),
        ],
        out_specs=pl.BlockSpec((B, 8, tile_n), lambda j: (0, 0, j),
                               memory_space=vmem),
        out_shape=jax.ShapeDtypeStruct((B, 8, n_pad), jnp.float32),
        compiler_params=pltpu.CompilerParams(
            dimension_semantics=("parallel",)),
        cost_estimate=pl.CostEstimate(
            flops=30 * B * n_pad,
            transcendentals=0,
            bytes_accessed=4 * B * n_pad * (1 + 3 + 3 + 8)),
    )(ind_f, reg_f, wh_f)

    # Single post-kernel fusion: transpose + static column selects + keep.
    rows = jnp.transpose(out[:, :, :N], (0, 2, 1))        # (B, N, 8)
    bbox = rows[:, :, 0:5]                                # [bidx, l1, t1, r1, b1]
    bbox_right = rows[:, :, jnp.array([0, 5, 2, 6, 4])]   # [bidx, l2, t1, r2, b1]

    bbox_keep = bbox.reshape(B * N, 5)
    bbox_right_keep = bbox_right.reshape(B * N, 5)
    # Same reduction expression as the PyTorch reference (no reassociation
    # surprises at exact-zero boundaries).
    keep = jnp.sum(bbox_keep[:, 1:5], axis=1) > 0

    # TODO(synk): `bbox_keep[keep, :]` boolean filtering yields a dynamic
    # shape, and self.model(batch, ...), self.loss(outputs, batch), .cuda()
    # are opaque injected modules — the keep mask is returned alongside the
    # full tensors instead of filtering / running the external model & loss.
    return bbox, bbox_right, bbox_keep, bbox_right_keep, keep


def _reference(ind_float, wh, reg, output_w, wh_scale):
    """Pure-JAX re-statement of the PyTorch math for verification."""
    xs = jnp.mod(ind_float, jnp.float32(output_w))
    ys = jnp.floor_divide(ind_float, jnp.float32(output_w))
    xs_right = xs + reg[:, :, 1]
    xs = xs + reg[:, :, 0]
    ys = ys + reg[:, :, 2]
    center = jnp.stack([xs, ys], axis=2)
    center_right = jnp.stack([xs_right, ys], axis=2)
    B, N = ind_float.shape
    bidx = jnp.broadcast_to(
        jnp.arange(B, dtype=jnp.float32)[:, None, None], (B, N, 1))
    half = 0.5 * wh[:, :, jnp.array([0, 2])] * wh_scale
    half_r = 0.5 * wh[:, :, jnp.array([1, 2])] * wh_scale
    bbox = jnp.concatenate([bidx, center - half, center + half], axis=2)
    bbox_r = jnp.concatenate(
        [bidx, center_right - half_r, center_right + half_r], axis=2)
    keep = jnp.sum(bbox.reshape(-1, 5)[:, 1:5], axis=1) > 0
    return bbox, bbox_r, keep


def _run_case(key, B, N, output_w, output_h, wh_scale):
    k_ind, k_wh, k_reg = jax.random.split(key, 3)
    ind_float = jnp.floor(
        jax.random.uniform(k_ind, (B, N), dtype=jnp.float32)
        * (output_w * output_h))
    wh = jax.random.uniform(k_wh, (B, N, 3), dtype=jnp.float32) * 4.0
    reg = jax.random.uniform(k_reg, (B, N, 3), dtype=jnp.float32)

    bbox, bbox_right, bbox_keep, bbox_right_keep, keep = jax.block_until_ready(
        model_with_loss_forward(
            ind_float, wh, reg, output_w=output_w, wh_scale=wh_scale))

    bbox_ref, bbox_r_ref, keep_ref = _reference(
        ind_float, wh, reg, output_w, wh_scale)

    assert jnp.allclose(bbox, bbox_ref, atol=1e-5), "bbox mismatch"
    assert jnp.allclose(bbox_right, bbox_r_ref, atol=1e-5), "bbox_right mismatch"
    assert jnp.allclose(bbox_keep, bbox_ref.reshape(-1, 5), atol=1e-5), \
        "bbox_keep mismatch"
    assert jnp.allclose(bbox_right_keep, bbox_r_ref.reshape(-1, 5), atol=1e-5), \
        "bbox_right_keep mismatch"
    assert jnp.array_equal(keep, keep_ref), "keep mask mismatch"


if __name__ == "__main__":
    key = jax.random.PRNGKey(0)
    k1, k2 = jax.random.split(key)

    # Case 1: batch=2, max objects=128, power-of-two 16x16 heatmap, scale 1.0.
    _run_case(k1, B=2, N=128, output_w=16, output_h=16, wh_scale=1.0)

    # Case 2: non-lane-multiple N and non-power-of-two width (exercises the
    # padding path and the index-decode fixup), scale 2.0.
    _run_case(k2, B=2, N=100, output_w=20, output_h=12, wh_scale=2.0)

    print("KERNEL_OK")
</pallas_src>

<mosaic_0001>
module attributes {stable_mosaic.version = 11 : i64} {
  func.func @_bbox_kernel(%arg0: i32, %arg1: memref<2x128xf32, #tpu.memory_space<vmem>>, %arg2: memref<2x128x3xf32, #tpu.memory_space<vmem>>, %arg3: memref<2x128x3xf32, #tpu.memory_space<vmem>>, %arg4: memref<2x8x128xf32, #tpu.memory_space<vmem>>) attributes {dimension_semantics = [#tpu.dimension_semantics<parallel>], iteration_bounds = array<i64: 1>, scalar_prefetch = 0 : i64, scratch_operands = 0 : i64, tpu.core_type = #tpu.core_type<tc>, window_params = [{transform_indices = @transform_0, window_bounds = array<i64: 2, 128>}, {transform_indices = @transform_1, window_bounds = array<i64: 2, 128, 3>}, {transform_indices = @transform_2, window_bounds = array<i64: 2, 128, 3>}, {transform_indices = @transform_3, window_bounds = array<i64: 2, 8, 128>}]} {
    %c0 = arith.constant 0 : index
    %c0_0 = arith.constant 0 : index
    %0 = vector.load %arg1[%c0, %c0_0] : memref<2x128xf32, #tpu.memory_space<vmem>>, vector<2x128xf32>
    %1 = vector.shape_cast %0 : vector<2x128xf32> to vector<2x1x128xf32>
    %c0_1 = arith.constant 0 : index
    %c0_2 = arith.constant 0 : index
    %c0_3 = arith.constant 0 : index
    %2 = vector.load %arg2[%c0_1, %c0_2, %c0_3] : memref<2x128x3xf32, #tpu.memory_space<vmem>>, vector<2x128x3xf32>
    %3 = tpu.transpose %2, [0, 2, 1] : vector<2x128x3xf32> -> vector<2x3x128xf32>
    %c0_4 = arith.constant 0 : index
    %c0_5 = arith.constant 0 : index
    %c0_6 = arith.constant 0 : index
    %4 = vector.load %arg3[%c0_4, %c0_5, %c0_6] : memref<2x128x3xf32, #tpu.memory_space<vmem>>, vector<2x128x3xf32>
    %5 = tpu.transpose %4, [0, 2, 1] : vector<2x128x3xf32> -> vector<2x3x128xf32>
    %6 = vector.extract_strided_slice %3 {offsets = [0, 0, 0], sizes = [2, 1, 128], strides = [1, 1, 1]} : vector<2x3x128xf32> to vector<2x1x128xf32>
    %7 = vector.extract_strided_slice %3 {offsets = [0, 1, 0], sizes = [2, 1, 128], strides = [1, 1, 1]} : vector<2x3x128xf32> to vector<2x1x128xf32>
    %8 = vector.extract_strided_slice %3 {offsets = [0, 2, 0], sizes = [2, 1, 128], strides = [1, 1, 1]} : vector<2x3x128xf32> to vector<2x1x128xf32>
    %9 = vector.extract_strided_slice %5 {offsets = [0, 0, 0], sizes = [2, 1, 128], strides = [1, 1, 1]} : vector<2x3x128xf32> to vector<2x1x128xf32>
    %10 = vector.extract_strided_slice %5 {offsets = [0, 1, 0], sizes = [2, 1, 128], strides = [1, 1, 1]} : vector<2x3x128xf32> to vector<2x1x128xf32>
    %11 = vector.extract_strided_slice %5 {offsets = [0, 2, 0], sizes = [2, 1, 128], strides = [1, 1, 1]} : vector<2x3x128xf32> to vector<2x1x128xf32>
    %cst = arith.constant 6.250000e-02 : f32
    %12 = vector.broadcast %cst : f32 to vector<2x1x128xf32>
    %13 = arith.mulf %1, %12 : vector<2x1x128xf32>
    %14 = math.floor %13 : vector<2x1x128xf32>
    %cst_7 = arith.constant 1.600000e+01 : f32
    %15 = vector.broadcast %cst_7 : f32 to vector<2x1x128xf32>
    %16 = arith.mulf %14, %15 : vector<2x1x128xf32>
    %17 = arith.subf %1, %16 : vector<2x1x128xf32>
    %cst_8 = arith.constant 1.600000e+01 : f32
    %18 = vector.broadcast %cst_8 : f32 to vector<2x1x128xf32>
    %19 = arith.cmpf oge, %17, %18 : vector<2x1x128xf32>
    %cst_9 = arith.constant 0.000000e+00 : f32
    %20 = vector.broadcast %cst_9 : f32 to vector<2x1x128xf32>
    %21 = arith.cmpf olt, %17, %20 : vector<2x1x128xf32>
    %cst_10 = arith.constant 1.000000e+00 : f32
    %22 = vector.broadcast %cst_10 : f32 to vector<2x1x128xf32>
    %23 = arith.addf %14, %22 : vector<2x1x128xf32>
    %cst_11 = arith.constant 1.000000e+00 : f32
    %24 = vector.broadcast %cst_11 : f32 to vector<2x1x128xf32>
    %25 = arith.subf %14, %24 : vector<2x1x128xf32>
    %26 = arith.select %21, %25, %14 : vector<2x1x128xi1>, vector<2x1x128xf32>
    %27 = arith.select %19, %23, %26 : vector<2x1x128xi1>, vector<2x1x128xf32>
    %cst_12 = arith.constant 1.600000e+01 : f32
    %28 = vector.broadcast %cst_12 : f32 to vector<2x1x128xf32>
    %29 = arith.subf %17, %28 : vector<2x1x128xf32>
    %cst_13 = arith.constant 1.600000e+01 : f32
    %30 = vector.broadcast %cst_13 : f32 to vector<2x1x128xf32>
    %31 = arith.addf %17, %30 : vector<2x1x128xf32>
    %32 = arith.select %21, %31, %17 : vector<2x1x128xi1>, vector<2x1x128xf32>
    %33 = arith.select %19, %29, %32 : vector<2x1x128xi1>, vector<2x1x128xf32>
    %34 = arith.addf %33, %6 : vector<2x1x128xf32>
    %35 = arith.addf %33, %7 : vector<2x1x128xf32>
    %36 = arith.addf %27, %8 : vector<2x1x128xf32>
    %cst_14 = arith.constant 5.000000e-01 : f32
    %37 = vector.broadcast %cst_14 : f32 to vector<2x1x128xf32>
    %38 = arith.mulf %37, %9 : vector<2x1x128xf32>
    %cst_15 = arith.constant 5.000000e-01 : f32
    %39 = vector.broadcast %cst_15 : f32 to vector<2x1x128xf32>
    %40 = arith.mulf %39, %10 : vector<2x1x128xf32>
    %cst_16 = arith.constant 5.000000e-01 : f32
    %41 = vector.broadcast %cst_16 : f32 to vector<2x1x128xf32>
    %42 = arith.mulf %41, %11 : vector<2x1x128xf32>
    %43 = tpu.iota {dimensions = array<i32: 0>} : vector<2x1x128xi32>
    %44 = arith.sitofp %43 : vector<2x1x128xi32> to vector<2x1x128xf32>
    %45 = arith.subf %34, %38 : vector<2x1x128xf32>
    %46 = arith.subf %36, %42 : vector<2x1x128xf32>
    %47 = arith.addf %34, %38 : vector<2x1x128xf32>
    %48 = arith.addf %36, %42 : vector<2x1x128xf32>
    %49 = arith.subf %35, %40 : vector<2x1x128xf32>
    %50 = arith.addf %35, %40 : vector<2x1x128xf32>
    %c0_17 = arith.constant 0 : index
    %c0_18 = arith.constant 0 : index
    %c0_19 = arith.constant 0 : index
    %51 = vector.load %arg4[%c0_17, %c0_18, %c0_19] : memref<2x8x128xf32, #tpu.memory_space<vmem>>, vector<2x1x128xf32>
    tpu.vector_store %arg4[%c0_17, %c0_18, %c0_19], %44 {strides = array<i32>} : memref<2x8x128xf32, #tpu.memory_space<vmem>>, vector<2x1x128xf32>,
    %c0_20 = arith.constant 0 : index
    %c1 = arith.constant 1 : index
    %c0_21 = arith.constant 0 : index
    %52 = vector.load %arg4[%c0_20, %c1, %c0_21] : memref<2x8x128xf32, #tpu.memory_space<vmem>>, vector<2x1x128xf32>
    tpu.vector_store %arg4[%c0_20, %c1, %c0_21], %45 {strides = array<i32>} : memref<2x8x128xf32, #tpu.memory_space<vmem>>, vector<2x1x128xf32>,
    %c0_22 = arith.constant 0 : index
    %c2 = arith.constant 2 : index
    %c0_23 = arith.constant 0 : index
    %53 = vector.load %arg4[%c0_22, %c2, %c0_23] : memref<2x8x128xf32, #tpu.memory_space<vmem>>, vector<2x1x128xf32>
    tpu.vector_store %arg4[%c0_22, %c2, %c0_23], %46 {strides = array<i32>} : memref<2x8x128xf32, #tpu.memory_space<vmem>>, vector<2x1x128xf32>,
    %c0_24 = arith.constant 0 : index
    %c3 = arith.constant 3 : index
    %c0_25 = arith.constant 0 : index
    %54 = vector.load %arg4[%c0_24, %c3, %c0_25] : memref<2x8x128xf32, #tpu.memory_space<vmem>>, vector<2x1x128xf32>
    tpu.vector_store %arg4[%c0_24, %c3, %c0_25], %47 {strides = array<i32>} : memref<2x8x128xf32, #tpu.memory_space<vmem>>, vector<2x1x128xf32>,
    %c0_26 = arith.constant 0 : index
    %c4 = arith.constant 4 : index
    %c0_27 = arith.constant 0 : index
    %55 = vector.load %arg4[%c0_26, %c4, %c0_27] : memref<2x8x128xf32, #tpu.memory_space<vmem>>, vector<2x1x128xf32>
    tpu.vector_store %arg4[%c0_26, %c4, %c0_27], %48 {strides = array<i32>} : memref<2x8x128xf32, #tpu.memory_space<vmem>>, vector<2x1x128xf32>,
    %c0_28 = arith.constant 0 : index
    %c5 = arith.constant 5 : index
    %c0_29 = arith.constant 0 : index
    %56 = vector.load %arg4[%c0_28, %c5, %c0_29] : memref<2x8x128xf32, #tpu.memory_space<vmem>>, vector<2x1x128xf32>
    tpu.vector_store %arg4[%c0_28, %c5, %c0_29], %49 {strides = array<i32>} : memref<2x8x128xf32, #tpu.memory_space<vmem>>, vector<2x1x128xf32>,
    %c0_30 = arith.constant 0 : index
    %c6 = arith.constant 6 : index
    %c0_31 = arith.constant 0 : index
    %57 = vector.load %arg4[%c0_30, %c6, %c0_31] : memref<2x8x128xf32, #tpu.memory_space<vmem>>, vector<2x1x128xf32>
    tpu.vector_store %arg4[%c0_30, %c6, %c0_31], %50 {strides = array<i32>} : memref<2x8x128xf32, #tpu.memory_space<vmem>>, vector<2x1x128xf32>,
    %58 = arith.addf %45, %46 : vector<2x1x128xf32>
    %59 = arith.addf %58, %47 : vector<2x1x128xf32>
    %60 = arith.addf %59, %48 : vector<2x1x128xf32>
    %c0_32 = arith.constant 0 : index
    %c7 = arith.constant 7 : index
    %c0_33 = arith.constant 0 : index
    %61 = vector.load %arg4[%c0_32, %c7, %c0_33] : memref<2x8x128xf32, #tpu.memory_space<vmem>>, vector<2x1x128xf32>
    tpu.vector_store %arg4[%c0_32, %c7, %c0_33], %60 {strides = array<i32>} : memref<2x8x128xf32, #tpu.memory_space<vmem>>, vector<2x1x128xf32>,
    return
  }
  func.func @transform_0(%arg0: i32) -> (i32, i32) {
    %c0_i32 = arith.constant 0 : i32
    %c0_i32_0 = arith.constant 0 : i32
    return %c0_i32, %arg0 : i32, i32
  }
  func.func @transform_1(%arg0: i32) -> (i32, i32, i32) {
    %c0_i32 = arith.constant 0 : i32
    %c0_i32_0 = arith.constant 0 : i32
    %c0_i32_1 = arith.constant 0 : i32
    return %c0_i32, %arg0, %c0_i32_0 : i32, i32, i32
  }
  func.func @transform_2(%arg0: i32) -> (i32, i32, i32) {
    %c0_i32 = arith.constant 0 : i32
    %c0_i32_0 = arith.constant 0 : i32
    %c0_i32_1 = arith.constant 0 : i32
    return %c0_i32, %arg0, %c0_i32_0 : i32, i32, i32
  }
  func.func @transform_3(%arg0: i32) -> (i32, i32, i32) {
    %c0_i32 = arith.constant 0 : i32
    %c0_i32_0 = arith.constant 0 : i32
    %c0_i32_1 = arith.constant 0 : i32
    return %c0_i32, %c0_i32_0, %arg0 : i32, i32, i32
  }
}

</mosaic_0001>

<llo_original>
// kernel: model_with_loss_forward.1
$region0: #{model_with_loss_forward.1}
  #allocation0 [shape = 'u32[]', space=smem, size = 0x4, offset = 0x4, fixed_abs, tag = 'smem constant byte address 0x4 - core index']
  #allocation1 [shape = 'u32[144,128]{1,0:T(1,128)}', space=vmem, size = 0x12000, scoped, tag = 'internal scratch']
  %s0 = inlined_call_operand.vmem [shape: f32[2,128], index: 0, kind: input, shape index: {}]
  %s1 = inlined_call_operand.vmem [shape: f32[2,128,3], index: 1, kind: input, shape index: {}]
  %s2 = inlined_call_operand.vmem [shape: f32[2,128,3], index: 2, kind: input, shape index: {}]
  %s3 = inlined_call_operand.vmem [shape: f32[2,8,128], index: 3, kind: output, shape index: {}]
  %s4 = sld [smem:[#allocation0]]
  $region22: #{model_with_loss_forward.1} parent=0
    _
  %s6 = ssub.s32 1, %s4
  %s7 = scalar_select 0, %s6, %s4
  // Predicated region
  $region2: #{model_with_loss_forward.1} parent=0 // pred_check
    _
  $region3: #{model_with_loss_forward.1} parent=0 // pred_check_branch
    %9 = sbr.rel (0) target = $region5
  $region4: #{model_with_loss_forward.1} parent=0 // pred_region
    _
  $region5: #{model_with_loss_forward.1} parent=0 // pred_fallthru
    _
  // Predicated region
  $region6: #{model_with_loss_forward.1} parent=0 // pred_check
    _
  $region7: #{model_with_loss_forward.1} parent=0 // pred_check_branch
    %11 = sbr.rel (0) target = $region9
  $region8: #{model_with_loss_forward.1} parent=0 // pred_region
    _
  $region9: #{model_with_loss_forward.1} parent=0 // pred_fallthru
    _
  // Predicated region
  $region10: #{model_with_loss_forward.1} parent=0 // pred_check
    _
  $region11: #{model_with_loss_forward.1} parent=0 // pred_check_branch
    %13 = sbr.rel (0) target = $region13
  $region12: #{model_with_loss_forward.1} parent=0 // pred_region
    _
  $region13: #{model_with_loss_forward.1} parent=0 // pred_fallthru
    _
  %v14 = vld [vmem:[%s0] sm:$0x3]
  %v17 = vunpack.c.l.s4 1966171168
  %v18 = vunpack.c.0.s8 %v17
  %v19 = vlaneseq
  %v20 = vshrl.u32 %v19, 7
  %v21 = vsub.s32 %v18, %v20
  %v22 = vrot.slane %v14, %v21
  %v23 = vcombine.high %v22, %v22
  %v25 = vunpack.c.l.s4 1966171168
  %v26 = vunpack.c.0.s8 %v25
  %v27 = vlaneseq
  %v28 = vshrl.u32 %v27, 7
  %v29 = vsub.s32 %v26, %v28
  %v30 = vrot.slane %v22, %v29
  %v32 = vunpack.c.l.s4 1966171168
  %v33 = vunpack.c.0.s8 %v32
  %v34 = vlaneseq
  %v35 = vshrl.u32 %v34, 7
  %v36 = vsub.s32 %v33, %v35
  %v37 = vrot.slane %v23, %v36
  %v40 = vld [vmem:[%s1] sm:$0xff]
  %v41 = vld [vmem:[%s1 + $0x8] sm:$0xff]
  %v42 = vld [vmem:[%s1 + $0x10] sm:$0xff]
  %v43 = vld [vmem:[%s1 + $0x18] sm:$0xff]
  %v44 = vld [vmem:[%s1 + $0x20] sm:$0xff]
  %v45 = vld [vmem:[%s1 + $0x28] sm:$0xff]
  %v46 = vld [vmem:[%s1 + $0x30] sm:$0xff]
  %v47 = vld [vmem:[%s1 + $0x38] sm:$0xff]
  %v48 = vld [vmem:[%s1 + $0x40] sm:$0xff]
  %v49 = vld [vmem:[%s1 + $0x48] sm:$0xff]
  %v50 = vld [vmem:[%s1 + $0x50] sm:$0xff]
  %v51 = vld [vmem:[%s1 + $0x58] sm:$0xff]
  %v52 = vld [vmem:[%s1 + $0x60] sm:$0xff]
  %v53 = vld [vmem:[%s1 + $0x68] sm:$0xff]
  %v54 = vld [vmem:[%s1 + $0x70] sm:$0xff]
  %v55 = vld [vmem:[%s1 + $0x78] sm:$0xff]
  %v56 = vld [vmem:[%s1 + $0x80] sm:$0xff]
  %v57 = vld [vmem:[%s1 + $0x88] sm:$0xff]
  %v58 = vld [vmem:[%s1 + $0x90] sm:$0xff]
  %v59 = vld [vmem:[%s1 + $0x98] sm:$0xff]
  %v60 = vld [vmem:[%s1 + $0xa0] sm:$0xff]
  %v61 = vld [vmem:[%s1 + $0xa8] sm:$0xff]
  %v62 = vld [vmem:[%s1 + $0xb0] sm:$0xff]
  %v63 = vld [vmem:[%s1 + $0xb8] sm:$0xff]
  %v64 = vld [vmem:[%s1 + $0xc0] sm:$0xff]
  %v65 = vld [vmem:[%s1 + $0xc8] sm:$0xff]
  %v66 = vld [vmem:[%s1 + $0xd0] sm:$0xff]
  %v67 = vld [vmem:[%s1 + $0xd8] sm:$0xff]
  %v68 = vld [vmem:[%s1 + $0xe0] sm:$0xff]
  %v69 = vld [vmem:[%s1 + $0xe8] sm:$0xff]
  %v70 = vld [vmem:[%s1 + $0xf0] sm:$0xff]
  %v71 = vld [vmem:[%s1 + $0xf8] sm:$0xff]
  %72 = vxpose.xlu0.b32.start [1/16] %v40, 128
  %73 = vxpose.xlu0.b32.cont [2/16] %v41, 128
  %74 = vxpose.xlu0.b32.cont [3/16] %v42, 128
  %75 = vxpose.xlu0.b32.cont [4/16] %v43, 128
  %76 = vxpose.xlu0.b32.cont [5/16] %v44, 128
  %77 = vxpose.xlu0.b32.cont [6/16] %v45, 128
  %78 = vxpose.xlu0.b32.cont [7/16] %v46, 128
  %79 = vxpose.xlu0.b32.cont [8/16] %v47, 128
  %80 = vxpose.xlu0.b32.cont [9/16] %v48, 128
  %81 = vxpose.xlu0.b32.cont [10/16] %v49, 128
  %82 = vxpose.xlu0.b32.cont [11/16] %v50, 128
  %83 = vxpose.xlu0.b32.cont [12/16] %v51, 128
  %84 = vxpose.xlu0.b32.cont [13/16] %v52, 128
  %85 = vxpose.xlu0.b32.cont [14/16] %v53, 128
  %86 = vxpose.xlu0.b32.cont [15/16] %v54, 128
  %87 = vxpose.xlu0.b32.end [16/16] %v55, 128
  %v88 = vpop.trf.xlu0
  %v89 = vpop.trf.xlu0
  %v90 = vpop.trf.xlu0
  %v91 = vpop.trf.xlu0
  %v92 = vpop.trf.xlu0
  %v93 = vpop.trf.xlu0
  %v94 = vpop.trf.xlu0
  %v95 = vpop.trf.xlu0
  %v96 = vpop.trf.xlu0
  %v97 = vpop.trf.xlu0
  %v98 = vpop.trf.xlu0
  %v99 = vpop.trf.xlu0
  %v100 = vpop.trf.xlu0
  %v101 = vpop.trf.xlu0
  %v102 = vpop.trf.xlu0
  %v103 = vpop.trf.xlu0
  %104 = vxpose.xlu0.b32.start [1/16] %v56, 128
  %105 = vxpose.xlu0.b32.cont [2/16] %v57, 128
  %106 = vxpose.xlu0.b32.cont [3/16] %v58, 128
  %107 = vxpose.xlu0.b32.cont [4/16] %v59, 128
  %108 = vxpose.xlu0.b32.cont [5/16] %v60, 128
  %109 = vxpose.xlu0.b32.cont [6/16] %v61, 128
  %110 = vxpose.xlu0.b32.cont [7/16] %v62, 128
  %111 = vxpose.xlu0.b32.cont [8/16] %v63, 128
  %112 = vxpose.xlu0.b32.cont [9/16] %v64, 128
  %113 = vxpose.xlu0.b32.cont [10/16] %v65, 128
  %114 = vxpose.xlu0.b32.cont [11/16] %v66, 128
  %115 = vxpose.xlu0.b32.cont [12/16] %v67, 128
  %116 = vxpose.xlu0.b32.cont [13/16] %v68, 128
  %117 = vxpose.xlu0.b32.cont [14/16] %v69, 128
  %118 = vxpose.xlu0.b32.cont [15/16] %v70, 128
  %119 = vxpose.xlu0.b32.end [16/16] %v71, 128
  %v120 = vpop.trf.xlu0
  %v121 = vpop.trf.xlu0
  %v122 = vpop.trf.xlu0
  %v123 = vpop.trf.xlu0
  %v124 = vpop.trf.xlu0
  %v125 = vpop.trf.xlu0
  %v126 = vpop.trf.xlu0
  %v127 = vpop.trf.xlu0
  %v128 = vpop.trf.xlu0
  %v129 = vpop.trf.xlu0
  %v130 = vpop.trf.xlu0
  %v131 = vpop.trf.xlu0
  %v132 = vpop.trf.xlu0
  %v133 = vpop.trf.xlu0
  %v134 = vpop.trf.xlu0
  %v135 = vpop.trf.xlu0
  %v136 = vld [vmem:[%s2] sm:$0xff]
  %v137 = vld [vmem:[%s2 + $0x8] sm:$0xff]
  %v138 = vld [vmem:[%s2 + $0x10] sm:$0xff]
  %v139 = vld [vmem:[%s2 + $0x18] sm:$0xff]
  %v140 = vld [vmem:[%s2 + $0x20] sm:$0xff]
  %v141 = vld [vmem:[%s2 + $0x28] sm:$0xff]
  %v142 = vld [vmem:[%s2 + $0x30] sm:$0xff]
  %v143 = vld [vmem:[%s2 + $0x38] sm:$0xff]
  %v144 = vld [vmem:[%s2 + $0x40] sm:$0xff]
  %v145 = vld [vmem:[%s2 + $0x48] sm:$0xff]
  %v146 = vld [vmem:[%s2 + $0x50] sm:$0xff]
  %v147 = vld [vmem:[%s2 + $0x58] sm:$0xff]
  %v148 = vld [vmem:[%s2 + $0x60] sm:$0xff]
  %v149 = vld [vmem:[%s2 + $0x68] sm:$0xff]
  %v150 = vld [vmem:[%s2 + $0x70] sm:$0xff]
  %v151 = vld [vmem:[%s2 + $0x78] sm:$0xff]
  %v152 = vld [vmem:[%s2 + $0x80] sm:$0xff]
  %v153 = vld [vmem:[%s2 + $0x88] sm:$0xff]
  %v154 = vld [vmem:[%s2 + $0x90] sm:$0xff]
  %v155 = vld [vmem:[%s2 + $0x98] sm:$0xff]
  %v156 = vld [vmem:[%s2 + $0xa0] sm:$0xff]
  %v157 = vld [vmem:[%s2 + $0xa8] sm:$0xff]
  %v158 = vld [vmem:[%s2 + $0xb0] sm:$0xff]
  %v159 = vld [vmem:[%s2 + $0xb8] sm:$0xff]
  %v160 = vld [vmem:[%s2 + $0xc0] sm:$0xff]
  %v161 = vld [vmem:[%s2 + $0xc8] sm:$0xff]
  %v162 = vld [vmem:[%s2 + $0xd0] sm:$0xff]
  %v163 = vld [vmem:[%s2 + $0xd8] sm:$0xff]
  %v164 = vld [vmem:[%s2 + $0xe0] sm:$0xff]
  %v165 = vld [vmem:[%s2 + $0xe8] sm:$0xff]
  %v166 = vld [vmem:[%s2 + $0xf0] sm:$0xff]
  %v167 = vld [vmem:[%s2 + $0xf8] sm:$0xff]
  %168 = vxpose.xlu0.b32.start [1/16] %v136, 128
  %169 = vxpose.xlu0.b32.cont [2/16] %v137, 128
  %170 = vxpose.xlu0.b32.cont [3/16] %v138, 128
  %171 = vxpose.xlu0.b32.cont [4/16] %v139, 128
  %172 = vxpose.xlu0.b32.cont [5/16] %v140, 128
  %173 = vxpose.xlu0.b32.cont [6/16] %v141, 128
  %174 = vxpose.xlu0.b32.cont [7/16] %v142, 128
  %175 = vxpose.xlu0.b32.cont [8/16] %v143, 128
  %176 = vxpose.xlu0.b32.cont [9/16] %v144, 128
  %177 = vxpose.xlu0.b32.cont [10/16] %v145, 128
  %178 = vxpose.xlu0.b32.cont [11/16] %v146, 128
  %179 = vxpose.xlu0.b32.cont [12/16] %v147, 128
  %180 = vxpose.xlu0.b32.cont [13/16] %v148, 128
  %181 = vxpose.xlu0.b32.cont [14/16] %v149, 128
  %182 = vxpose.xlu0.b32.cont [15/16] %v150, 128
  %183 = vxpose.xlu0.b32.end [16/16] %v151, 128
  %v184 = vpop.trf.xlu0
  %v185 = vpop.trf.xlu0
  %v186 = vpop.trf.xlu0
  %v187 = vpop.trf.xlu0
  %v188 = vpop.trf.xlu0
  %v189 = vpop.trf.xlu0
  %v190 = vpop.trf.xlu0
  %v191 = vpop.trf.xlu0
  %v192 = vpop.trf.xlu0
  %v193 = vpop.trf.xlu0
  %v194 = vpop.trf.xlu0
  %v195 = vpop.trf.xlu0
  %v196 = vpop.trf.xlu0
  %v197 = vpop.trf.xlu0
  %v198 = vpop.trf.xlu0
  %v199 = vpop.trf.xlu0
  %200 = vxpose.xlu0.b32.start [1/16] %v152, 128
  %201 = vxpose.xlu0.b32.cont [2/16] %v153, 128
  %202 = vxpose.xlu0.b32.cont [3/16] %v154, 128
  %203 = vxpose.xlu0.b32.cont [4/16] %v155, 128
  %204 = vxpose.xlu0.b32.cont [5/16] %v156, 128
  %205 = vxpose.xlu0.b32.cont [6/16] %v157, 128
  %206 = vxpose.xlu0.b32.cont [7/16] %v158, 128
  %207 = vxpose.xlu0.b32.cont [8/16] %v159, 128
  %208 = vxpose.xlu0.b32.cont [9/16] %v160, 128
  %209 = vxpose.xlu0.b32.cont [10/16] %v161, 128
  %210 = vxpose.xlu0.b32.cont [11/16] %v162, 128
  %211 = vxpose.xlu0.b32.cont [12/16] %v163, 128
  %212 = vxpose.xlu0.b32.cont [13/16] %v164, 128
  %213 = vxpose.xlu0.b32.cont [14/16] %v165, 128
  %214 = vxpose.xlu0.b32.cont [15/16] %v166, 128
  %215 = vxpose.xlu0.b32.end [16/16] %v167, 128
  %v216 = vpop.trf.xlu0
  %v217 = vpop.trf.xlu0
  %v218 = vpop.trf.xlu0
  %v219 = vpop.trf.xlu0
  %v220 = vpop.trf.xlu0
  %v221 = vpop.trf.xlu0
  %v222 = vpop.trf.xlu0
  %v223 = vpop.trf.xlu0
  %v224 = vpop.trf.xlu0
  %v225 = vpop.trf.xlu0
  %v226 = vpop.trf.xlu0
  %v227 = vpop.trf.xlu0
  %v228 = vpop.trf.xlu0
  %v229 = vpop.trf.xlu0
  %v230 = vpop.trf.xlu0
  %v231 = vpop.trf.xlu0
  %v232 = vmul.f32 %v30, 0.0625
  %v233 = vmul.f32 %v37, 0.0625
  %v234 = vfloor.f32 %v232
  %v235 = vfloor.f32 %v233
  %v236 = vmul.f32 %v234, 16.0
  %v237 = vmul.f32 %v235, 16.0
  %v238 = vsub.f32 %v30, %v236
  %v239 = vsub.f32 %v37, %v237
  %vm240 = vcmp.ge.f32.partialorder %v238, 16.0
  %vm241 = vcmp.ge.f32.partialorder %v239, 16.0
  %vm242 = vcmp.lt.f32.partialorder %v238, 0.0
  %vm243 = vcmp.lt.f32.partialorder %v239, 0.0
  %v244 = vadd.f32 %v234, 1.0
  %v245 = vadd.f32 %v235, 1.0
  %v246 = vsub.f32 %v234, 1.0
  %v247 = vsub.f32 %v235, 1.0
  %v248 = vsel %vm242, %v246, %v234
  %v249 = vsel %vm243, %v247, %v235
  %v250 = vsel %vm240, %v244, %v248
  %v251 = vsel %vm241, %v245, %v249
  %v252 = vsub.f32 %v238, 16.0
  %v253 = vsub.f32 %v239, 16.0
  %v254 = vadd.f32 %v238, 16.0
  %v255 = vadd.f32 %v239, 16.0
  %v256 = vsel %vm242, %v254, %v238
  %v257 = vsel %vm243, %v255, %v239
  %v258 = vsel %vm240, %v252, %v256
  %v259 = vsel %vm241, %v253, %v257
  %v260 = vadd.f32 %v258, %v88
  %v261 = vadd.f32 %v259, %v120
  %v265 = vunpack.c.l.s4 1966171168
  %v266 = vunpack.c.0.s8 %v265
  %v267 = vlaneseq
  %v268 = vshrl.u32 %v267, 7
  %v269 = vsub.s32 %v266, %v268
  %v270 = vrot.slane %v88, %v269
  %v271 = vcombine.high %v270, %v270
  %v273 = vunpack.c.l.s4 1966171168
  %v274 = vunpack.c.0.s8 %v273
  %v275 = vlaneseq
  %v276 = vshrl.u32 %v275, 7
  %v277 = vsub.s32 %v274, %v276
  %v278 = vrot.slane %v270, %v277
  %v280 = vunpack.c.l.s4 1966171168
  %v281 = vunpack.c.0.s8 %v280
  %v282 = vlaneseq
  %v283 = vshrl.u32 %v282, 7
  %v284 = vsub.s32 %v281, %v283
  %v285 = vrot.slane %v271, %v284
  %v287 = vunpack.c.l.s4 1966171168
  %v288 = vunpack.c.0.s8 %v287
  %v289 = vlaneseq
  %v290 = vshrl.u32 %v289, 7
  %v291 = vsub.s32 %v288, %v290
  %v292 = vrot.slane %v120, %v291
  %v293 = vcombine.high %v292, %v292
  %v295 = vunpack.c.l.s4 1966171168
  %v296 = vunpack.c.0.s8 %v295
  %v297 = vlaneseq
  %v298 = vshrl.u32 %v297, 7
  %v299 = vsub.s32 %v296, %v298
  %v300 = vrot.slane %v292, %v299
  %v302 = vunpack.c.l.s4 1966171168
  %v303 = vunpack.c.0.s8 %v302
  %v304 = vlaneseq
  %v305 = vshrl.u32 %v304, 7
  %v306 = vsub.s32 %v303, %v305
  %v307 = vrot.slane %v293, %v306
  %v310 = vadd.f32 %v258, %v285
  %v311 = vadd.f32 %v259, %v307
  %v312 = vcombine.high %v278, %v278
  %v313 = vcombine.high %v300, %v300
  %v316 = vadd.f32 %v250, %v312
  %v317 = vadd.f32 %v251, %v313
  %v318 = vmul.f32 %v184, 0.5
  %v319 = vmul.f32 %v216, 0.5
  %v320 = vcvt.s32.f32 0
  %v321 = vcvt.s32.f32 1
  %v322 = vsub.f32 %v260, %v318
  %v323 = vsub.f32 %v261, %v319
  %v327 = vunpack.c.l.s4 1966171168
  %v328 = vunpack.c.0.s8 %v327
  %v329 = vlaneseq
  %v330 = vshrl.u32 %v329, 7
  %v331 = vsub.s32 %v328, %v330
  %v332 = vrot.slane %v318, %v331
  %v334 = vunpack.c.l.s4 1966171168
  %v335 = vunpack.c.0.s8 %v334
  %v336 = vlaneseq
  %v337 = vshrl.u32 %v336, 7
  %v338 = vsub.s32 %v335, %v337
  %v339 = vrot.slane %v332, %v338
  %v340 = vcombine.high %v339, %v339
  %v342 = vunpack.c.l.s4 1966171168
  %v343 = vunpack.c.0.s8 %v342
  %v344 = vlaneseq
  %v345 = vshrl.u32 %v344, 7
  %v346 = vsub.s32 %v343, %v345
  %v347 = vrot.slane %v319, %v346
  %v349 = vunpack.c.l.s4 1966171168
  %v350 = vunpack.c.0.s8 %v349
  %v351 = vlaneseq
  %v352 = vshrl.u32 %v351, 7
  %v353 = vsub.s32 %v350, %v352
  %v354 = vrot.slane %v347, %v353
  %v355 = vcombine.high %v354, %v354
  %v358 = vsub.f32 %v316, %v340
  %v359 = vsub.f32 %v317, %v355
  %v360 = vadd.f32 %v260, %v318
  %v361 = vadd.f32 %v261, %v319
  %v362 = vadd.f32 %v316, %v340
  %v363 = vadd.f32 %v317, %v355
  %v364 = vcombine.high %v332, %v332
  %v366 = vunpack.c.l.s4 1966171168
  %v367 = vunpack.c.0.s8 %v366
  %v368 = vlaneseq
  %v369 = vshrl.u32 %v368, 7
  %v370 = vsub.s32 %v367, %v369
  %v371 = vrot.slane %v364, %v370
  %v372 = vcombine.high %v347, %v347
  %v374 = vunpack.c.l.s4 1966171168
  %v375 = vunpack.c.0.s8 %v374
  %v376 = vlaneseq
  %v377 = vshrl.u32 %v376, 7
  %v378 = vsub.s32 %v375, %v377
  %v379 = vrot.slane %v372, %v378
  %v382 = vsub.f32 %v310, %v371
  %v383 = vsub.f32 %v311, %v379
  %v384 = vadd.f32 %v310, %v371
  %v385 = vadd.f32 %v311, %v379
  %386 = vst [vmem:[%s3] sm:$0x1] %v320
  %387 = vst [vmem:[%s3 + $0x8] sm:$0x1] %v321
  %388 = vst [vmem:[%s3 + $0x1] sm:$0x1] %v322
  %389 = vst [vmem:[%s3 + $0x9] sm:$0x1] %v323
  %390 = vst [vmem:[%s3 + $0x2] sm:$0x1] %v358
  %391 = vst [vmem:[%s3 + $0xa] sm:$0x1] %v359
  %392 = vst [vmem:[%s3 + $0x3] sm:$0x1] %v360
  %393 = vst [vmem:[%s3 + $0xb] sm:$0x1] %v361
  %394 = vst [vmem:[%s3 + $0x4] sm:$0x1] %v362
  %395 = vst [vmem:[%s3 + $0xc] sm:$0x1] %v363
  %396 = vst [vmem:[%s3 + $0x5] sm:$0x1] %v382
  %397 = vst [vmem:[%s3 + $0xd] sm:$0x1] %v383
  %398 = vst [vmem:[%s3 + $0x6] sm:$0x1] %v384
  %399 = vst [vmem:[%s3 + $0xe] sm:$0x1] %v385
  %v400 = vadd.f32 %v322, %v358
  %v401 = vadd.f32 %v323, %v359
  %v402 = vadd.f32 %v400, %v360
  %v403 = vadd.f32 %v401, %v361
  %v404 = vadd.f32 %v402, %v362
  %v405 = vadd.f32 %v403, %v363
  %406 = vst [vmem:[%s3 + $0x7] sm:$0x1] %v404
  %407 = vst [vmem:[%s3 + $0xf] sm:$0x1] %v405
  // Predicated region
  $region14: #{model_with_loss_forward.1} parent=0 // pred_check
    _
  $region15: #{model_with_loss_forward.1} parent=0 // pred_check_branch
    %409 = sbr.rel (0) target = $region17
  $region16: #{model_with_loss_forward.1} parent=0 // pred_region
    _
  $region17: #{model_with_loss_forward.1} parent=0 // pred_fallthru
    _
  // Predicated region
  $region18: #{model_with_loss_forward.1} parent=0 // pred_check
    _
  $region19: #{model_with_loss_forward.1} parent=0 // pred_check_branch
    %411 = sbr.rel (0) target = $region21
  $region20: #{model_with_loss_forward.1} parent=0 // pred_region
    _
  $region21: #{model_with_loss_forward.1} parent=0 // pred_fallthru
    _

</llo_original>
